<compile_context>
chip_gen: v7x
topology: tpu7x:2x2x1
jax: 0.10.0
libtpu: 0.0.40
codegen_flags: <defaults>
</compile_context>

<pallas_src>
import functools

import jax
import jax.numpy as jnp
import numpy as np
from jax.experimental import pallas as pl
from jax.experimental.pallas import tpu as pltpu

# TODO(synk): the optional `mask` argument of Attention.forward is not
# implemented; only the default mask=None path is translated.


def _attention_kernel(bias_ref, x_ref, w_ref, o_ref, *, feature_dim, groups):
    """One batch tile.

    x_ref:   (TB, S, groups * feature_dim) in VMEM -- `groups` original batch
             rows packed along the lane axis (groups == 1 -> natural layout).
    w_ref:   (1, groups * feature_dim) in VMEM -- weight tiled per group.
    bias_ref:(1,) in SMEM.
    o_ref:   (TB, groups * feature_dim).
    """
    f = feature_dim
    x = x_ref[...]                       # f32 (TB, S, groups*f)
    w = w_ref[...]                       # (1, groups*f)
    bias = bias_ref[0]                   # scalar (SMEM)

    # One full-lane VPU multiply shared by every group (hoisted out of loop).
    prod = x * w[None, :, :]             # (TB, S, groups*f)

    parts = []
    for g in range(groups):              # unrolled at trace time (groups <= 4)
        sl = slice(g * f, (g + 1) * f)
        # eij = x @ w as a cross-lane (XLU) reduce of the shared product.
        eij = jnp.sum(prod[:, :, sl], axis=-1)                # (TB, S)
        # exp without max-subtraction: tanh bounds eij to [-1, 1].
        a = jnp.exp(jnp.tanh(eij + bias))                     # (TB, S)
        # Reciprocal-multiply keeps the divide off the VALU.
        # NOTE: "+ 1e-10" is applied AFTER the division, matching PyTorch.
        inv = pl.reciprocal(jnp.sum(a, axis=1, keepdims=True))  # (TB, 1)
        a = a * inv + 1e-10
        # Weighted sum over step_dim: sublane (XLU) reduce.
        parts.append(jnp.sum(x[:, :, sl] * a[:, :, None], axis=1))  # (TB, f)

    res = parts[0] if groups == 1 else jnp.concatenate(parts, axis=-1)
    o_ref[...] = res.astype(o_ref.dtype)


def _pick_batch_tile(n_rows, row_bytes, max_tile_bytes=4 << 20):
    """Largest batch tile that (a) divides n_rows, (b) keeps the
    double-buffered input tile under `max_tile_bytes`, and (c) keeps the
    output block's second-minor dim a multiple of 8 (or the full extent).
    Tiny problems get a single grid step (no per-step pipeline overhead)."""
    cap = max(1, max_tile_bytes // max(row_bytes, 1))
    if cap >= n_rows:
        return n_rows
    for t in range(min(cap, n_rows), 0, -1):
        if n_rows % t == 0 and (t % 8 == 0 or t == n_rows):
            return t
    return n_rows


def attention_forward(x, weight, bias):
    """x: (B, S, F) float32, weight: (F, 1), bias: (1,). Returns (B, F)."""
    B, S, F = x.shape
    w = weight.reshape(1, F)

    # Lane packing: with F < 128 every vreg would be mostly empty and the
    # output store masked. Pack `groups = 128 // F` batch rows per lane row
    # (pure layout plumbing done once in the wrapper).
    groups = 128 // F if (F < 128 and 128 % F == 0) else 1
    if groups > 1 and B % groups == 0:
        bp = B // groups
        xk = (x.reshape(bp, groups, S, F)
               .transpose(0, 2, 1, 3)
               .reshape(bp, S, groups * F))
    else:
        groups = 1
        bp = B
        xk = x
    lanes = groups * F
    # Weight replicated along lanes once in the wrapper (lane-dense load).
    wk = jnp.tile(w, (1, groups)) if groups > 1 else w

    row_bytes = S * lanes * xk.dtype.itemsize
    tb = _pick_batch_tile(bp, row_bytes)
    grid = (bp // tb,)

    kernel = functools.partial(_attention_kernel, feature_dim=F, groups=groups)

    out = pl.pallas_call(
        kernel,
        out_shape=jax.ShapeDtypeStruct((bp, lanes), x.dtype),
        grid_spec=pltpu.PrefetchScalarGridSpec(
            num_scalar_prefetch=0,
            grid=grid,
            in_specs=[
                pl.BlockSpec(memory_space=pltpu.SMEM),                # bias scalar
                pl.BlockSpec((tb, S, lanes), lambda i: (i, 0, 0)),    # x tile
                pl.BlockSpec((1, lanes), lambda i: (0, 0)),           # weight
            ],
            out_specs=pl.BlockSpec((tb, lanes), lambda i: (i, 0)),
        ),
        compiler_params=pltpu.CompilerParams(
            dimension_semantics=("parallel",),
            vmem_limit_bytes=32 * 1024 * 1024,
        ),
    )(bias, xk, wk)

    # Row-major unpack of the lane packing is a free reshape.
    return out.reshape(B, F)


def reference_attention(x, weight, bias):
    B, S, F = x.shape
    eij = (x.reshape(-1, F) @ weight).reshape(B, S) + bias[0]
    eij = jnp.tanh(eij)
    a = jnp.exp(eij)
    a = a / jnp.sum(a, axis=1, keepdims=True) + 1e-10
    return jnp.sum(x * a[:, :, None], axis=1)


if __name__ == "__main__":
    step_dim, feature_dim = 8, 32

    key = jax.random.PRNGKey(0)
    kx1, kx2, kw = jax.random.split(key, 3)

    # Xavier-uniform init for weight of shape (feature_dim, 1), zeros for bias.
    bound = float(np.sqrt(6.0 / (feature_dim + 1)))
    weight = jax.random.uniform(
        kw, (feature_dim, 1), dtype=jnp.float32, minval=-bound, maxval=bound
    )
    bias = jnp.zeros((1,), dtype=jnp.float32)

    # Case 1: spec-sized batch=2 (exercises the unpacked fallback path).
    x_small = jax.random.normal(kx1, (2, step_dim, feature_dim), dtype=jnp.float32)
    out_small = jax.block_until_ready(attention_forward(x_small, weight, bias))
    np.testing.assert_allclose(
        np.asarray(out_small),
        np.asarray(reference_attention(x_small, weight, bias)),
        rtol=1e-5, atol=1e-5,
    )

    # Case 2: batch=64 (exercises lane packing, single-step grid).
    x_big = jax.random.normal(kx2, (64, step_dim, feature_dim), dtype=jnp.float32)
    out_big = jax.block_until_ready(attention_forward(x_big, weight, bias))
    np.testing.assert_allclose(
        np.asarray(out_big),
        np.asarray(reference_attention(x_big, weight, bias)),
        rtol=1e-5, atol=1e-5,
    )

    print("KERNEL_OK")
</pallas_src>

<mosaic_0001>
module attributes {stable_mosaic.version = 11 : i64} {
  func.func @_attention_kernel(%arg0: i32, %arg1: memref<1xf32, #tpu.memory_space<smem>>, %arg2: memref<2x8x32xf32, #tpu.memory_space<vmem>>, %arg3: memref<1x32xf32, #tpu.memory_space<vmem>>, %arg4: memref<2x32xf32, #tpu.memory_space<vmem>>) attributes {dimension_semantics = [#tpu.dimension_semantics<parallel>], iteration_bounds = array<i64: 1>, scalar_prefetch = 0 : i64, scratch_operands = 0 : i64, tpu.core_type = #tpu.core_type<tc>, window_params = [{transform_indices = @transform_0, window_bounds = array<i64: 1>}, {transform_indices = @transform_1, window_bounds = array<i64: 2, 8, 32>}, {pipeline_mode = #tpu.pipeline_mode<synchronous>, transform_indices = @transform_2, window_bounds = array<i64: 1, 32>}, {transform_indices = @transform_3, window_bounds = array<i64: 2, 32>}]} {
    %c0 = arith.constant 0 : index
    %c0_0 = arith.constant 0 : index
    %c0_1 = arith.constant 0 : index
    %0 = vector.load %arg2[%c0, %c0_0, %c0_1] : memref<2x8x32xf32, #tpu.memory_space<vmem>>, vector<2x8x32xf32>
    %c0_2 = arith.constant 0 : index
    %c0_3 = arith.constant 0 : index
    %1 = vector.load %arg3[%c0_2, %c0_3] : memref<1x32xf32, #tpu.memory_space<vmem>>, vector<1x32xf32>
    %c0_4 = arith.constant 0 : index
    %2 = memref.load %arg1[%c0_4] : memref<1xf32, #tpu.memory_space<smem>>
    %3 = vector.shape_cast %1 : vector<1x32xf32> to vector<1x1x32xf32>
    %4 = vector.broadcast %3 : vector<1x1x32xf32> to vector<2x8x32xf32>
    %5 = arith.mulf %0, %4 : vector<2x8x32xf32>
    %cst = arith.constant dense<0.000000e+00> : vector<2x8xf32>
    %6 = vector.multi_reduction <add>, %5, %cst [2] : vector<2x8x32xf32> to vector<2x8xf32>
    %7 = vector.broadcast %2 : f32 to vector<2x8xf32>
    %8 = arith.addf %6, %7 : vector<2x8xf32>
    %9 = math.tanh %8 : vector<2x8xf32>
    %10 = math.exp %9 : vector<2x8xf32>
    %cst_5 = arith.constant dense<0.000000e+00> : vector<2xf32>
    %11 = vector.multi_reduction <add>, %10, %cst_5 [1] : vector<2x8xf32> to vector<2xf32>
    %12 = vector.shape_cast %11 : vector<2xf32> to vector<2x1xf32>
    %13 = tpu.reciprocal %12 : vector<2x1xf32> -> vector<2x1xf32>
    %14 = vector.broadcast %13 : vector<2x1xf32> to vector<2x8xf32>
    %15 = arith.mulf %10, %14 : vector<2x8xf32>
    %cst_6 = arith.constant 1.000000e-10 : f32
    %16 = vector.broadcast %cst_6 : f32 to vector<2x8xf32>
    %17 = arith.addf %15, %16 : vector<2x8xf32>
    %18 = vector.shape_cast %17 : vector<2x8xf32> to vector<2x8x1xf32>
    %19 = vector.broadcast %18 : vector<2x8x1xf32> to vector<2x8x32xf32>
    %20 = arith.mulf %0, %19 : vector<2x8x32xf32>
    %cst_7 = arith.constant dense<0.000000e+00> : vector<2x32xf32>
    %21 = vector.multi_reduction <add>, %20, %cst_7 [1] : vector<2x8x32xf32> to vector<2x32xf32>
    %c0_8 = arith.constant 0 : index
    %c0_9 = arith.constant 0 : index
    %22 = vector.load %arg4[%c0_8, %c0_9] : memref<2x32xf32, #tpu.memory_space<vmem>>, vector<2x32xf32>
    tpu.vector_store %arg4[%c0_8, %c0_9], %21 {strides = array<i32>} : memref<2x32xf32, #tpu.memory_space<vmem>>, vector<2x32xf32>,
    return
  }
  func.func @transform_0(%arg0: i32) -> i32 {
    %c0_i32 = arith.constant 0 : i32
    %c0_i32_0 = arith.constant 0 : i32
    return %c0_i32 : i32
  }
  func.func @transform_1(%arg0: i32) -> (i32, i32, i32) {
    %c0_i32 = arith.constant 0 : i32
    %c0_i32_0 = arith.constant 0 : i32
    %c0_i32_1 = arith.constant 0 : i32
    return %arg0, %c0_i32, %c0_i32_0 : i32, i32, i32
  }
  func.func @transform_2(%arg0: i32) -> (i32, i32) {
    %c0_i32 = arith.constant 0 : i32
    %c0_i32_0 = arith.constant 0 : i32
    %c0_i32_1 = arith.constant 0 : i32
    return %c0_i32, %c0_i32_0 : i32, i32
  }
  func.func @transform_3(%arg0: i32) -> (i32, i32) {
    %c0_i32 = arith.constant 0 : i32
    %c0_i32_0 = arith.constant 0 : i32
    return %arg0, %c0_i32 : i32, i32
  }
}

</mosaic_0001>

<llo_original>
// kernel: tpu_custom_call.1
$region0: #{tpu_custom_call.1}
  #allocation0 [shape = 'u32[]', space=smem, size = 0x4, offset = 0x4, fixed_abs, tag = 'smem constant byte address 0x4 - core index']
  #allocation1 [shape = 'u32[144,128]{1,0:T(1,128)}', space=vmem, size = 0x12000, scoped, tag = 'internal scratch']
  #allocation2 [shape = 'f32[1]{0:T(128)S(6)}', space=smem, size = 0x200, scoped, tag = 'scoped memory for tpu_custom_call.1']
  %s0 = inlined_call_operand.<no memory space> [shape: f32[1], index: 0, kind: input, shape index: {}]
  %s1 = inlined_call_operand.hbm [shape: f32[2,8,32], index: 1, kind: input, shape index: {}]
  %s2 = inlined_call_operand.vmem [shape: f32[1,32], index: 2, kind: input, shape index: {}]
  %s3 = inlined_call_operand.hbm [shape: f32[2,32], index: 3, kind: output, shape index: {}]
  %s4 = sld [smem:[#allocation0]]
  $region26: #{tpu_custom_call.1} parent=0
    _
  %s6 = ssub.s32 1, %s4
  %s7 = scalar_select 0, %s6, %s4
  %8 = sst [smem:[#allocation2]] %s0
  $region1: #{tpu_custom_call.1} parent=0
    #allocation3 [shape = 'u8[8192]{0}', space=vmem, size = 0x2000, scoped, tag = 'input window, operand 1, single buffered']
    #allocation4 [shape = 's32[1]{0}', space=sflag, size = 0x4, scoped, tag = 'scoped memory for tpu_custom_call.1']
    #allocation5 [shape = 's32[1]{0}', space=sflag, size = 0x4, scoped, tag = 'scoped memory for tpu_custom_call.1']
    #allocation6 [shape = 'u8[1024]{0}', space=vmem, size = 0x400, scoped, tag = 'output window, operand 0, single buffered']
    %9 = vsyncpa [#allocation4], 0
    %10 = vsyncpa [#allocation5], 0
    // Predicated region
    $region2: #{tpu_custom_call.1} parent=1 // pred_check
      _
    $region3: #{tpu_custom_call.1} parent=1 // pred_check_branch
      %12 = sbr.rel (0) target = $region5
    $region4: #{tpu_custom_call.1} parent=1 // pred_region
      _
    $region5: #{tpu_custom_call.1} parent=1 // pred_fallthru
      _
    // Predicated region
    $region6: #{tpu_custom_call.1} parent=1 // pred_check
      _
    $region7: #{tpu_custom_call.1} parent=1 // pred_check_branch
      %14 = sbr.rel (0) target = $region9
    $region8: #{tpu_custom_call.1} parent=1 // pred_region
      %s16 = ssub.s32 256, 256
      %17 = vsyncadd [#allocation4], %s16
      %s18 = sshll.u32 [#allocation3], 4
      %s19 = int_to_ptr.vmem [resolvable:$true] %s18
      %24 = dma.hbm_to_vmem [thread:$0]  %s1, 256, %s19, [#allocation4], 128, 128, 8
    $region9: #{tpu_custom_call.1} parent=1 // pred_fallthru
      _
    // Predicated region
    $region10: #{tpu_custom_call.1} parent=1 // pred_check
      _
    $region11: #{tpu_custom_call.1} parent=1 // pred_check_branch
      %26 = sbr.rel (0) target = $region13
    $region12: #{tpu_custom_call.1} parent=1 // pred_region
      _
    $region13: #{tpu_custom_call.1} parent=1 // pred_fallthru
      _
    // Predicated region
    $region14: #{tpu_custom_call.1} parent=1 // pred_check
      _
    $region15: #{tpu_custom_call.1} parent=1 // pred_check_branch
      %28 = sbr.rel (0) target = $region17
    $region16: #{tpu_custom_call.1} parent=1 // pred_region
      %29 = dma.done [#allocation4], 256
    $region17: #{tpu_custom_call.1} parent=1 // pred_fallthru
      _
    %v30 = vld [vmem:[#allocation3] sm:$0xff]
    %v31 = vld [vmem:[#allocation3 + $0x8] sm:$0xff]
    %v32 = vld [vmem:[%s2] sm:$0x1]
    %s33 = sld [smem:[#allocation2]]
    %v35 = vlaneseq
    %v36 = vshrl.u32 %v35, 7
    %v37 = vsub.s32 0, %v36
    %v38 = vrot.slane %v32, %v37
    %v40 = vmul.f32 %v30, %v38
    %v41 = vmul.f32 %v31, %v38
    %vm42 = vcmask 261120
    %v43 = vsel %vm42, %v40, 0.0
    %44 = vadd.xlane.f32.xlu0 %v43
    %v45 = vpop.xlane.xlu0 %44
    %v46 = vsel %vm42, %v41, 0.0
    %47 = vadd.xlane.f32.xlu0 %v46
    %v48 = vpop.xlane.xlu0 %47
    %v49 = vstv %s33
    %v50 = vadd.f32 %v45, %v49
    %v51 = vadd.f32 %v48, %v49
    %v52 = vtanh.pop %v50
    %v53 = vtanh.pop %v51
    %v54 = vmul.f32 %v52, 1.442695
    %v55 = vpow.pop %v54
    %v56 = vmul.f32 %v53, 1.442695
    %v57 = vpow.pop %v56
    %v60 = vlaneseq
    %v61 = vand.u32 %v60, 127
    %v62 = vlaneseq
    %v63 = vshrl.u32 %v62, 7
    %v64 = vsub.s32 %v61, %v63
    %v65 = vrot.slane %v55, %v64
    %v66 = vlaneseq
    %v67 = vshrl.u32 %v66, 7
    %v68 = vsub.s32 %v61, %v67
    %v69 = vrot.slane %v57, %v68
    %vm70 = vcmask 1041409
    %v71 = vsel %vm70, %v69, %v65
    %vm73 = vcmask 58368
    %v74 = vsel %vm73, %v71, 0.0
    %75 = vadd.xlane.f32.xlu0 %v74
    %v76 = vpop.xlane.xlu0 %75
    %v77 = vrcp.pop %v76
    %v79 = vlaneseq
    %v80 = vshrl.u32 %v79, 7
    %v81 = vsub.s32 0, %v80
    %v82 = vrot.slane %v77, %v81
    %v83 = vlaneseq
    %v84 = vshrl.u32 %v83, 7
    %v85 = vsub.s32 1, %v84
    %v86 = vrot.slane %v77, %v85
    %v89 = vmul.f32 %v55, %v82
    %v90 = vmul.f32 %v57, %v86
    %v91 = vadd.f32 %v89, 1e-10
    %v92 = vadd.f32 %v90, 1e-10
    %94 = vset.pattern.permute.xlu0 0
    %95 = vperm.xlu0 %94, %v91
    %v96 = vpop.permute.xlu0 %95
    %99 = vset.pattern.permute.xlu0 0
    %100 = vperm.xlu0 %99, %v92
    %v101 = vpop.permute.xlu0 %100
    %v103 = vmul.f32 %v30, %v96
    %v104 = vmul.f32 %v31, %v101
    %v105 = vsel %vm42, %v103, 0.0
    %v106 = vrot.slane %v105, 4
    %v107 = vadd.f32 %v105, %v106
    %v108 = vrot.slane %v107, 2
    %v109 = vadd.f32 %v107, %v108
    %v110 = vrot.slane %v109, 1
    %v111 = vadd.f32 %v109, %v110
    %v112 = vsel %vm42, %v104, 0.0
    %v113 = vrot.slane %v112, 4
    %v114 = vadd.f32 %v112, %v113
    %v115 = vrot.slane %v114, 2
    %v116 = vadd.f32 %v114, %v115
    %v117 = vrot.slane %v116, 1
    %v118 = vadd.f32 %v116, %v117
    %v121 = vsel %vm70, %v118, %v111
    %vm123 = vcmask 254976
    %124 = vst.msk [vmem:[#allocation6] sm:$0x3] %vm123, %v121
    // Predicated region
    $region18: #{tpu_custom_call.1} parent=1 // pred_check
      _
    $region19: #{tpu_custom_call.1} parent=1 // pred_check_branch
      %126 = sbr.rel (0) target = $region21
    $region20: #{tpu_custom_call.1} parent=1 // pred_region
      %s128 = ssub.s32 32, 32
      %129 = vsyncadd [#allocation5], %s128
      %s131 = sshll.u32 [#allocation6], 4
      %s132 = int_to_ptr.vmem [resolvable:$true] %s131
      %134 = dma.vmem_to_hbm [thread:$0]  %s132, 32, %s3, [#allocation5]
    $region21: #{tpu_custom_call.1} parent=1 // pred_fallthru
      _
    // Predicated region
    $region22: #{tpu_custom_call.1} parent=1 // pred_check
      _
    $region23: #{tpu_custom_call.1} parent=1 // pred_check_branch
      %136 = sbr.rel (0) target = $region25
    $region24: #{tpu_custom_call.1} parent=1 // pred_region
      %137 = dma.done [#allocation5], 32
    $region25: #{tpu_custom_call.1} parent=1 // pred_fallthru
      _
    %138 = vsyncpa [#allocation4], 1
    %139 = vsyncpa [#allocation5], 1

</llo_original>
